<compile_context>
chip_gen: v6e
topology: v6e:2x2x1
jax: 0.10.0
libtpu: 0.0.40
codegen_flags: <defaults>
</compile_context>

<pallas_src>
import jax
import jax.numpy as jnp
from jax.experimental import pallas as pl
from jax.experimental.pallas import tpu as pltpu


def se_kernel(x_ref, w1t_ref, w2t_ref, o_ref):
    """One (Bt, C, HW) activation block: fused squeeze -> excitation -> scale."""
    x = x_ref[...]                                               # (Bt, C, HW), native dtype

    # ---- squeeze: global average pool over the spatial (lane) axis, f32 accum ----
    pooled = jnp.mean(x, axis=-1, dtype=jnp.float32)             # (Bt, C)

    # ---- excitation: two tiny MXU mat-vecs (batched over Bt), f32 throughout ----
    w1t = w1t_ref[...].astype(jnp.float32)                       # (C, Cr)  == Linear1.weight.T
    w2t = w2t_ref[...].astype(jnp.float32)                       # (Cr, C)  == Linear2.weight.T
    h = jnp.dot(pooled, w1t, preferred_element_type=jnp.float32,
                precision=jax.lax.Precision.HIGHEST)             # (Bt, Cr)
    h = h * jax.nn.sigmoid(h)                                    # SiLU
    s = jnp.dot(h, w2t, preferred_element_type=jnp.float32,
                precision=jax.lax.Precision.HIGHEST)             # (Bt, C)
    gate = jax.nn.sigmoid(s)                                     # (Bt, C)

    # ---- scale: broadcast the per-(b, c) gate over spatial, store lane-dense ----
    o_ref[...] = x * gate[:, :, None].astype(x.dtype)


def se_block(x, w1, w2, *, target_block_bytes=4 << 20, min_grid_steps=8):
    """x: (B, C, H, W); w1: (C//r, C) = Linear1.weight; w2: (C, C//r) = Linear2.weight."""
    B, C, H, W = x.shape
    HW = H * W

    x_flat = x.reshape(B, C, HW)         # contiguous reshape; HW on the lane axis
    w1t = jnp.transpose(w1)              # (C, Cr)
    w2t = jnp.transpose(w2)              # (Cr, C)

    itemsize = jnp.dtype(x.dtype).itemsize
    slab_bytes = C * HW * itemsize
    weight_bytes = (w1t.size + w2t.size) * jnp.dtype(w1.dtype).itemsize

    # --- per-generation VMEM budget: ~75% of physical (~48 MiB v7x, ~96 MiB v5e/v6e)
    try:
        vmem_cap = int(getattr(pltpu.get_tpu_info(), "vmem_capacity_bytes", 64 << 20))
    except Exception:
        vmem_cap = 64 << 20              # conservative (v7x-sized) if query unavailable
    vmem_budget = (vmem_cap * 3) // 4

    # in + out blocks are double-buffered -> ~4x block bytes, plus resident weights
    # plus a margin for compiler-internal scratch.
    def footprint(bt):
        return 4 * bt * slab_bytes + weight_bytes + (1 << 20)

    # --- choose the batch tile Bt ---
    bt = max(1, min(B, target_block_bytes // max(1, slab_bytes)))
    # keep >= min_grid_steps blocks when the batch is big enough (pipeline
    # overlap within a core + megacore sharding across cores on v7x)
    if B >= min_grid_steps and B // bt < min_grid_steps:
        bt = max(1, B // min_grid_steps)
    # guard: shrink until double-buffered in+out fits the VMEM budget
    while bt > 1 and footprint(bt) > vmem_budget:
        bt -= 1

    grid = (pl.cdiv(B, bt),)
    vmem_limit = int(min(vmem_budget, max(32 << 20, footprint(bt))))

    out_flat = pl.pallas_call(
        se_kernel,
        out_shape=jax.ShapeDtypeStruct((B, C, HW), x.dtype),
        grid_spec=pltpu.PrefetchScalarGridSpec(
            num_scalar_prefetch=0,
            grid=grid,
            in_specs=[
                # (Bt, C, HW) activation slab per grid step.
                pl.BlockSpec((bt, C, HW), lambda b: (b, 0, 0)),
                # Tiny weights: whole-array, VMEM-resident across all steps.
                pl.BlockSpec(memory_space=pltpu.MemorySpace.VMEM),
                pl.BlockSpec(memory_space=pltpu.MemorySpace.VMEM),
            ],
            out_specs=pl.BlockSpec((bt, C, HW), lambda b: (b, 0, 0)),
        ),
        compiler_params=pltpu.CompilerParams(
            dimension_semantics=("parallel",),   # batch blocks are independent
            vmem_limit_bytes=vmem_limit,
        ),
    )(x_flat, w1t, w2t)

    return out_flat.reshape(B, C, H, W)


def se_block_ref(x, w1, w2):
    """Pure-JAX reference matching the PyTorch forward."""
    y = jnp.mean(x, axis=(2, 3))                                           # AdaptiveAvgPool2d(1)
    y = jnp.dot(y, w1.T, precision=jax.lax.Precision.HIGHEST)              # Linear(C -> Cr), bias=False
    y = y * jax.nn.sigmoid(y)                                              # SiLU
    y = jnp.dot(y, w2.T, precision=jax.lax.Precision.HIGHEST)              # Linear(Cr -> C), bias=False
    y = jax.nn.sigmoid(y)                                                  # Sigmoid
    return x * y[:, :, None, None]


if __name__ == "__main__":
    # SEBlock(channels=64, reduction=16); spatial 16x16 keeps the lane axis
    # (HW=256) a multiple of 128 -> unmasked lane-dense stores.
    B, C, H, W = 2, 64, 16, 16
    reduction = 16
    Cr = C // reduction

    key = jax.random.PRNGKey(0)
    kx, k1, k2 = jax.random.split(key, 3)
    x = jax.random.normal(kx, (B, C, H, W), dtype=jnp.float32)
    # deterministic synthetic "Linear" weights (bias=False)
    w1 = jax.random.normal(k1, (Cr, C), dtype=jnp.float32) * 0.1   # Linear(C -> Cr).weight
    w2 = jax.random.normal(k2, (C, Cr), dtype=jnp.float32) * 0.1   # Linear(Cr -> C).weight

    out = jax.block_until_ready(se_block(x, w1, w2))
    ref = se_block_ref(x, w1, w2)

    assert out.shape == (B, C, H, W)
    assert jnp.allclose(out, ref, atol=1e-5, rtol=1e-5), "mismatch vs reference"

    print("KERNEL_OK")
</pallas_src>

<mosaic_0001>
module attributes {stable_mosaic.version = 11 : i64} {
  func.func @se_kernel(%arg0: i32, %arg1: memref<2x64x256xf32, #tpu.memory_space<vmem>>, %arg2: memref<64x4xf32, #tpu.memory_space<vmem>>, %arg3: memref<4x64xf32, #tpu.memory_space<vmem>>, %arg4: memref<2x64x256xf32, #tpu.memory_space<vmem>>) attributes {dimension_semantics = [#tpu.dimension_semantics<parallel>], iteration_bounds = array<i64: 1>, scalar_prefetch = 0 : i64, scratch_operands = 0 : i64, tpu.core_type = #tpu.core_type<tc>, window_params = [{transform_indices = @transform_0, window_bounds = array<i64: 2, 64, 256>}, {pipeline_mode = #tpu.pipeline_mode<synchronous>, transform_indices = @transform_1, window_bounds = array<i64: 64, 4>}, {pipeline_mode = #tpu.pipeline_mode<synchronous>, transform_indices = @transform_2, window_bounds = array<i64: 4, 64>}, {transform_indices = @transform_3, window_bounds = array<i64: 2, 64, 256>}]} {
    %c0 = arith.constant 0 : index
    %c0_0 = arith.constant 0 : index
    %c0_1 = arith.constant 0 : index
    %0 = vector.load %arg1[%c0, %c0_0, %c0_1] : memref<2x64x256xf32, #tpu.memory_space<vmem>>, vector<2x64x256xf32>
    %cst = arith.constant dense<0.000000e+00> : vector<2x64xf32>
    %1 = vector.multi_reduction <add>, %0, %cst [2] : vector<2x64x256xf32> to vector<2x64xf32>
    %cst_2 = arith.constant 2.560000e+02 : f32
    %2 = vector.broadcast %cst_2 : f32 to vector<2x64xf32>
    %3 = arith.divf %1, %2 : vector<2x64xf32>
    %c0_3 = arith.constant 0 : index
    %c0_4 = arith.constant 0 : index
    %4 = vector.load %arg2[%c0_3, %c0_4] : memref<64x4xf32, #tpu.memory_space<vmem>>, vector<64x4xf32>
    %c0_5 = arith.constant 0 : index
    %c0_6 = arith.constant 0 : index
    %5 = vector.load %arg3[%c0_5, %c0_6] : memref<4x64xf32, #tpu.memory_space<vmem>>, vector<4x64xf32>
    %cst_7 = arith.constant dense<0.000000e+00> : vector<2x4xf32>
    %6 = tpu.matmul %3, %4, %cst_7 {dimension_numbers = #tpu.dot_dimension_numbers<[1], [0], [0], [1], [0, 0, 1, 1], [], []>, precision = #tpu.contract_precision<fp32>} : vector<2x64xf32>, vector<64x4xf32>, vector<2x4xf32> -> vector<2x4xf32>
    %7 = arith.negf %6 : vector<2x4xf32>
    %8 = math.exp %7 : vector<2x4xf32>
    %cst_8 = arith.constant 1.000000e+00 : f32
    %9 = vector.broadcast %cst_8 : f32 to vector<2x4xf32>
    %10 = arith.addf %9, %8 : vector<2x4xf32>
    %11 = arith.divf %9, %10 : vector<2x4xf32>
    %12 = arith.mulf %6, %11 : vector<2x4xf32>
    %cst_9 = arith.constant dense<0.000000e+00> : vector<2x64xf32>
    %13 = tpu.matmul %12, %5, %cst_9 {dimension_numbers = #tpu.dot_dimension_numbers<[1], [0], [0], [1], [0, 0, 1, 1], [], []>, precision = #tpu.contract_precision<fp32>} : vector<2x4xf32>, vector<4x64xf32>, vector<2x64xf32> -> vector<2x64xf32>
    %14 = arith.negf %13 : vector<2x64xf32>
    %15 = math.exp %14 : vector<2x64xf32>
    %cst_10 = arith.constant 1.000000e+00 : f32
    %16 = vector.broadcast %cst_10 : f32 to vector<2x64xf32>
    %17 = arith.addf %16, %15 : vector<2x64xf32>
    %18 = arith.divf %16, %17 : vector<2x64xf32>
    %19 = vector.shape_cast %18 : vector<2x64xf32> to vector<2x64x1xf32>
    %20 = vector.broadcast %19 : vector<2x64x1xf32> to vector<2x64x256xf32>
    %21 = arith.mulf %0, %20 : vector<2x64x256xf32>
    %c0_11 = arith.constant 0 : index
    %c0_12 = arith.constant 0 : index
    %c0_13 = arith.constant 0 : index
    %22 = vector.load %arg4[%c0_11, %c0_12, %c0_13] : memref<2x64x256xf32, #tpu.memory_space<vmem>>, vector<2x64x256xf32>
    tpu.vector_store %arg4[%c0_11, %c0_12, %c0_13], %21 {strides = array<i32>} : memref<2x64x256xf32, #tpu.memory_space<vmem>>, vector<2x64x256xf32>,
    return
  }
  func.func @transform_0(%arg0: i32) -> (i32, i32, i32) {
    %c0_i32 = arith.constant 0 : i32
    %c0_i32_0 = arith.constant 0 : i32
    %c0_i32_1 = arith.constant 0 : i32
    return %arg0, %c0_i32, %c0_i32_0 : i32, i32, i32
  }
  func.func @transform_1(%arg0: i32) -> (i32, i32) {
    %c0_i32 = arith.constant 0 : i32
    %c0_i32_0 = arith.constant 0 : i32
    %c0_i32_1 = arith.constant 0 : i32
    return %c0_i32, %c0_i32_0 : i32, i32
  }
  func.func @transform_2(%arg0: i32) -> (i32, i32) {
    %c0_i32 = arith.constant 0 : i32
    %c0_i32_0 = arith.constant 0 : i32
    %c0_i32_1 = arith.constant 0 : i32
    return %c0_i32, %c0_i32_0 : i32, i32
  }
  func.func @transform_3(%arg0: i32) -> (i32, i32, i32) {
    %c0_i32 = arith.constant 0 : i32
    %c0_i32_0 = arith.constant 0 : i32
    %c0_i32_1 = arith.constant 0 : i32
    return %arg0, %c0_i32, %c0_i32_0 : i32, i32, i32
  }
}

</mosaic_0001>

<llo_original>
// kernel: tpu_custom_call.1
$region0: #{tpu_custom_call.1}
  #allocation0 [shape = 'u32[]', space=smem, size = 0x4, offset = 0x4, fixed_abs, tag = 'smem constant byte address 0x4 - core index']
  #allocation1 [shape = 'u32[144,128]{1,0:T(1,128)}', space=vmem, size = 0x12000, scoped, tag = 'internal scratch']
  %s0 = inlined_call_operand.hbm [shape: f32[2,64,256], index: 0, kind: input, shape index: {}]
  %s1 = inlined_call_operand.vmem [shape: f32[64,4], index: 1, kind: input, shape index: {}]
  %s2 = inlined_call_operand.vmem [shape: f32[4,64], index: 2, kind: input, shape index: {}]
  %s3 = inlined_call_operand.hbm [shape: f32[2,64,256], index: 3, kind: output, shape index: {}]
  %s4 = sld [smem:[#allocation0]]
  $region26: #{tpu_custom_call.1} parent=0
    _
  %s6 = ssub.s32 1, %s4
  %s7 = scalar_select 0, %s6, %s4
  $region1: #{tpu_custom_call.1} parent=0
    #allocation2 [shape = 'u8[131072]{0}', space=vmem, size = 0x20000, scoped, tag = 'input window, operand 0, single buffered']
    #allocation3 [shape = 's32[1]{0}', space=sflag, size = 0x4, scoped, tag = 'scoped memory for tpu_custom_call.1']
    #allocation4 [shape = 's32[1]{0}', space=sflag, size = 0x4, scoped, tag = 'scoped memory for tpu_custom_call.1']
    #allocation5 [shape = 'u8[131072]{0}', space=vmem, size = 0x20000, scoped, tag = 'output window, operand 0, single buffered']
    %8 = vsyncpa [#allocation3], 0
    %9 = vsyncpa [#allocation4], 0
    // Predicated region
    $region2: #{tpu_custom_call.1} parent=1 // pred_check
      _
    $region3: #{tpu_custom_call.1} parent=1 // pred_check_branch
      %11 = sbr.rel (0) target = $region5
    $region4: #{tpu_custom_call.1} parent=1 // pred_region
      %s13 = ssub.s32 4096, 4096
      %14 = vsyncadd [#allocation3], %s13
      %s15 = sshll.u32 [#allocation2], 4
      %s16 = int_to_ptr.vmem [resolvable:$true] %s15
      %21 = dma.hbm_to_vmem [thread:$0]  %s0, 4096, %s16, [#allocation3], 256, 256, 16
    $region5: #{tpu_custom_call.1} parent=1 // pred_fallthru
      _
    // Predicated region
    $region6: #{tpu_custom_call.1} parent=1 // pred_check
      _
    $region7: #{tpu_custom_call.1} parent=1 // pred_check_branch
      %23 = sbr.rel (0) target = $region9
    $region8: #{tpu_custom_call.1} parent=1 // pred_region
      _
    $region9: #{tpu_custom_call.1} parent=1 // pred_fallthru
      _
    // Predicated region
    $region10: #{tpu_custom_call.1} parent=1 // pred_check
      _
    $region11: #{tpu_custom_call.1} parent=1 // pred_check_branch
      %25 = sbr.rel (0) target = $region13
    $region12: #{tpu_custom_call.1} parent=1 // pred_region
      _
    $region13: #{tpu_custom_call.1} parent=1 // pred_fallthru
      _
    // Predicated region
    $region14: #{tpu_custom_call.1} parent=1 // pred_check
      _
    $region15: #{tpu_custom_call.1} parent=1 // pred_check_branch
      %27 = sbr.rel (0) target = $region17
    $region16: #{tpu_custom_call.1} parent=1 // pred_region
      %28 = dma.done [#allocation3], 4096
    $region17: #{tpu_custom_call.1} parent=1 // pred_fallthru
      _
    %v29 = vld [vmem:[#allocation2] sm:$0xff]
    %v30 = vld [vmem:[#allocation2 + $0x8] sm:$0xff]
    %v31 = vld [vmem:[#allocation2 + $0x10] sm:$0xff]
    %v32 = vld [vmem:[#allocation2 + $0x18] sm:$0xff]
    %v33 = vld [vmem:[#allocation2 + $0x20] sm:$0xff]
    %v34 = vld [vmem:[#allocation2 + $0x28] sm:$0xff]
    %v35 = vld [vmem:[#allocation2 + $0x30] sm:$0xff]
    %v36 = vld [vmem:[#allocation2 + $0x38] sm:$0xff]
    %v37 = vld [vmem:[#allocation2 + $0x40] sm:$0xff]
    %v38 = vld [vmem:[#allocation2 + $0x48] sm:$0xff]
    %v39 = vld [vmem:[#allocation2 + $0x50] sm:$0xff]
    %v40 = vld [vmem:[#allocation2 + $0x58] sm:$0xff]
    %v41 = vld [vmem:[#allocation2 + $0x60] sm:$0xff]
    %v42 = vld [vmem:[#allocation2 + $0x68] sm:$0xff]
    %v43 = vld [vmem:[#allocation2 + $0x70] sm:$0xff]
    %v44 = vld [vmem:[#allocation2 + $0x78] sm:$0xff]
    %v45 = vld [vmem:[#allocation2 + $0x80] sm:$0xff]
    %v46 = vld [vmem:[#allocation2 + $0x88] sm:$0xff]
    %v47 = vld [vmem:[#allocation2 + $0x90] sm:$0xff]
    %v48 = vld [vmem:[#allocation2 + $0x98] sm:$0xff]
    %v49 = vld [vmem:[#allocation2 + $0xa0] sm:$0xff]
    %v50 = vld [vmem:[#allocation2 + $0xa8] sm:$0xff]
    %v51 = vld [vmem:[#allocation2 + $0xb0] sm:$0xff]
    %v52 = vld [vmem:[#allocation2 + $0xb8] sm:$0xff]
    %v53 = vld [vmem:[#allocation2 + $0xc0] sm:$0xff]
    %v54 = vld [vmem:[#allocation2 + $0xc8] sm:$0xff]
    %v55 = vld [vmem:[#allocation2 + $0xd0] sm:$0xff]
    %v56 = vld [vmem:[#allocation2 + $0xd8] sm:$0xff]
    %v57 = vld [vmem:[#allocation2 + $0xe0] sm:$0xff]
    %v58 = vld [vmem:[#allocation2 + $0xe8] sm:$0xff]
    %v59 = vld [vmem:[#allocation2 + $0xf0] sm:$0xff]
    %v60 = vld [vmem:[#allocation2 + $0xf8] sm:$0xff]
    %v61 = vadd.f32 %v29, %v30
    %62 = vadd.xlane.f32.xlu0 %v61
    %v63 = vpop.xlane.xlu0 %62
    %v64 = vadd.f32 %v31, %v32
    %65 = vadd.xlane.f32.xlu0 %v64
    %v66 = vpop.xlane.xlu0 %65
    %v67 = vadd.f32 %v33, %v34
    %68 = vadd.xlane.f32.xlu0 %v67
    %v69 = vpop.xlane.xlu0 %68
    %v70 = vadd.f32 %v35, %v36
    %71 = vadd.xlane.f32.xlu0 %v70
    %v72 = vpop.xlane.xlu0 %71
    %v73 = vadd.f32 %v37, %v38
    %74 = vadd.xlane.f32.xlu0 %v73
    %v75 = vpop.xlane.xlu0 %74
    %v76 = vadd.f32 %v39, %v40
    %77 = vadd.xlane.f32.xlu0 %v76
    %v78 = vpop.xlane.xlu0 %77
    %v79 = vadd.f32 %v41, %v42
    %80 = vadd.xlane.f32.xlu0 %v79
    %v81 = vpop.xlane.xlu0 %80
    %v82 = vadd.f32 %v43, %v44
    %83 = vadd.xlane.f32.xlu0 %v82
    %v84 = vpop.xlane.xlu0 %83
    %v85 = vadd.f32 %v45, %v46
    %86 = vadd.xlane.f32.xlu0 %v85
    %v87 = vpop.xlane.xlu0 %86
    %v88 = vadd.f32 %v47, %v48
    %89 = vadd.xlane.f32.xlu0 %v88
    %v90 = vpop.xlane.xlu0 %89
    %v91 = vadd.f32 %v49, %v50
    %92 = vadd.xlane.f32.xlu0 %v91
    %v93 = vpop.xlane.xlu0 %92
    %v94 = vadd.f32 %v51, %v52
    %95 = vadd.xlane.f32.xlu0 %v94
    %v96 = vpop.xlane.xlu0 %95
    %v97 = vadd.f32 %v53, %v54
    %98 = vadd.xlane.f32.xlu0 %v97
    %v99 = vpop.xlane.xlu0 %98
    %v100 = vadd.f32 %v55, %v56
    %101 = vadd.xlane.f32.xlu0 %v100
    %v102 = vpop.xlane.xlu0 %101
    %v103 = vadd.f32 %v57, %v58
    %104 = vadd.xlane.f32.xlu0 %v103
    %v105 = vpop.xlane.xlu0 %104
    %v106 = vadd.f32 %v59, %v60
    %107 = vadd.xlane.f32.xlu0 %v106
    %v108 = vpop.xlane.xlu0 %107
    %v109 = vrcp.pop 256.0
    %v110 = vmul.f32 %v63, %v109
    %v111 = vmul.f32 %v66, %v109
    %v112 = vmul.f32 %v69, %v109
    %v113 = vmul.f32 %v72, %v109
    %v114 = vmul.f32 %v75, %v109
    %v115 = vmul.f32 %v78, %v109
    %v116 = vmul.f32 %v81, %v109
    %v117 = vmul.f32 %v84, %v109
    %v118 = vmul.f32 %v87, %v109
    %v119 = vmul.f32 %v90, %v109
    %v120 = vmul.f32 %v93, %v109
    %v121 = vmul.f32 %v96, %v109
    %v122 = vmul.f32 %v99, %v109
    %v123 = vmul.f32 %v102, %v109
    %v124 = vmul.f32 %v105, %v109
    %v125 = vmul.f32 %v108, %v109
    %v126 = vld [vmem:[%s1] sm:$0xff]
    %v127 = vld [vmem:[%s1 + $0x8] sm:$0xff]
    %v128 = vld [vmem:[%s1 + $0x10] sm:$0xff]
    %v129 = vld [vmem:[%s1 + $0x18] sm:$0xff]
    %v130 = vld [vmem:[%s1 + $0x20] sm:$0xff]
    %v131 = vld [vmem:[%s1 + $0x28] sm:$0xff]
    %v132 = vld [vmem:[%s1 + $0x30] sm:$0xff]
    %v133 = vld [vmem:[%s1 + $0x38] sm:$0xff]
    %v134 = vld [vmem:[%s2] sm:$0xf]
    %v151 = vlaneseq
    %v152 = vand.u32 %v151, 127
    %v153 = vlaneseq
    %v154 = vshrl.u32 %v153, 7
    %v155 = vsub.s32 %v152, %v154
    %v156 = vrot.slane %v110, %v155
    %v157 = vadd.s32 %v152, 4294967288
    %v158 = vlaneseq
    %v159 = vshrl.u32 %v158, 7
    %v160 = vsub.s32 %v157, %v159
    %v161 = vrot.slane %v111, %v160
    %vm162 = vcmask 130112
    %v163 = vsel %vm162, %v161, %v156
    %v164 = vadd.s32 %v152, 4294967280
    %v165 = vlaneseq
    %v166 = vshrl.u32 %v165, 7
    %v167 = vsub.s32 %v164, %v166
    %v168 = vrot.slane %v112, %v167
    %vm169 = vcmask 195712
    %v170 = vsel %vm169, %v168, %v163
    %v171 = vadd.s32 %v152, 4294967272
    %v172 = vlaneseq
    %v173 = vshrl.u32 %v172, 7
    %v174 = vsub.s32 %v171, %v173
    %v175 = vrot.slane %v113, %v174
    %vm176 = vcmask 261312
    %v177 = vsel %vm176, %v175, %v170
    %v178 = vadd.s32 %v152, 4294967264
    %v179 = vlaneseq
    %v180 = vshrl.u32 %v179, 7
    %v181 = vsub.s32 %v178, %v180
    %v182 = vrot.slane %v114, %v181
    %vm183 = vcmask 326912
    %v184 = vsel %vm183, %v182, %v177
    %v185 = vadd.s32 %v152, 4294967256
    %v186 = vlaneseq
    %v187 = vshrl.u32 %v186, 7
    %v188 = vsub.s32 %v185, %v187
    %v189 = vrot.slane %v115, %v188
    %vm190 = vcmask 392512
    %v191 = vsel %vm190, %v189, %v184
    %v192 = vadd.s32 %v152, 4294967248
    %v193 = vlaneseq
    %v194 = vshrl.u32 %v193, 7
    %v195 = vsub.s32 %v192, %v194
    %v196 = vrot.slane %v116, %v195
    %vm197 = vcmask 458112
    %v198 = vsel %vm197, %v196, %v191
    %v199 = vadd.s32 %v152, 4294967240
    %v200 = vlaneseq
    %v201 = vshrl.u32 %v200, 7
    %v202 = vsub.s32 %v199, %v201
    %v203 = vrot.slane %v117, %v202
    %vm204 = vcmask 523712
    %v205 = vsel %vm204, %v203, %v198
    %v206 = vlaneseq
    %v207 = vshrl.u32 %v206, 7
    %v208 = vsub.s32 %v152, %v207
    %v209 = vrot.slane %v118, %v208
    %v210 = vlaneseq
    %v211 = vshrl.u32 %v210, 7
    %v212 = vsub.s32 %v157, %v211
    %v213 = vrot.slane %v119, %v212
    %v214 = vsel %vm162, %v213, %v209
    %v215 = vlaneseq
    %v216 = vshrl.u32 %v215, 7
    %v217 = vsub.s32 %v164, %v216
    %v218 = vrot.slane %v120, %v217
    %v219 = vsel %vm169, %v218, %v214
    %v220 = vlaneseq
    %v221 = vshrl.u32 %v220, 7
    %v222 = vsub.s32 %v171, %v221
    %v223 = vrot.slane %v121, %v222
    %v224 = vsel %vm176, %v223, %v219
    %v225 = vlaneseq
    %v226 = vshrl.u32 %v225, 7
    %v227 = vsub.s32 %v178, %v226
    %v228 = vrot.slane %v122, %v227
    %v229 = vsel %vm183, %v228, %v224
    %v230 = vlaneseq
    %v231 = vshrl.u32 %v230, 7
    %v232 = vsub.s32 %v185, %v231
    %v233 = vrot.slane %v123, %v232
    %v234 = vsel %vm190, %v233, %v229
    %v235 = vlaneseq
    %v236 = vshrl.u32 %v235, 7
    %v237 = vsub.s32 %v192, %v236
    %v238 = vrot.slane %v124, %v237
    %v239 = vsel %vm197, %v238, %v234
    %v240 = vlaneseq
    %v241 = vshrl.u32 %v240, 7
    %v242 = vsub.s32 %v199, %v241
    %v243 = vrot.slane %v125, %v242
    %v244 = vsel %vm204, %v243, %v239
    %vm245 = vcmask 1041409
    %v246 = vsel %vm245, %v244, %v205
    %vm247 = vcmask 523264
    %v248 = vsel %vm247, %v246, 0
    %250 = vmatprep.subr.mxu0 0.0
    %251 = vmatpush1.msra.mxu0 0.0
    %252 = vmatprep.subr.mxu0 0.0
    %253 = vmatpush1.msra.mxu0 0.0
    %254 = vmatprep.subr.mxu0 0.0
    %255 = vmatpush1.msra.mxu0 0.0
    %256 = vmatprep.subr.mxu0 0.0
    %257 = vmatpush1.msra.mxu0 0.0
    %258 = vmatprep.subr.mxu0 0.0
    %259 = vmatpush1.msra.mxu0 0.0
    %260 = vmatprep.subr.mxu0 0.0
    %261 = vmatpush1.msra.mxu0 0.0
    %262 = vmatprep.subr.mxu0 0.0
    %263 = vmatpush1.msra.mxu0 0.0
    %264 = vmatprep.subr.mxu0 0.0
    %265 = vmatpush1.msra.mxu0 0.0
    %266 = vmatprep.subr.mxu0 0.0
    %v267 = vand.u32 %v133, 4294901760
    %268 = vmatpush1.msra.mxu0 %v267
    %269 = vmatprep.subr.mxu0 0.0
    %v270 = vand.u32 %v132, 4294901760
    %271 = vmatpush1.msra.mxu0 %v270
    %272 = vmatprep.subr.mxu0 0.0
    %v273 = vand.u32 %v131, 4294901760
    %274 = vmatpush1.msra.mxu0 %v273
    %275 = vmatprep.subr.mxu0 0.0
    %v276 = vand.u32 %v130, 4294901760
    %277 = vmatpush1.msra.mxu0 %v276
    %278 = vmatprep.subr.mxu0 0.0
    %v279 = vand.u32 %v129, 4294901760
    %280 = vmatpush1.msra.mxu0 %v279
    %281 = vmatprep.subr.mxu0 0.0
    %v282 = vand.u32 %v128, 4294901760
    %283 = vmatpush1.msra.mxu0 %v282
    %284 = vmatprep.subr.mxu0 0.0
    %v285 = vand.u32 %v127, 4294901760
    %286 = vmatpush1.msra.mxu0 %v285
    %287 = vmatprep.subr.mxu0 0.0
    %v288 = vand.u32 %v126, 4294901760
    %289 = vmatpush1.msra.mxu0 %v288
    %290 = vmatprep.subr.mxu0 0.0
    %291 = vmatpush2.msra.mxu0 0.0
    %292 = vmatprep.subr.mxu0 0.0
    %293 = vmatpush2.msra.mxu0 0.0
    %294 = vmatprep.subr.mxu0 0.0
    %295 = vmatpush2.msra.mxu0 0.0
    %296 = vmatprep.subr.mxu0 0.0
    %297 = vmatpush2.msra.mxu0 0.0
    %298 = vmatprep.subr.mxu0 0.0
    %299 = vmatpush2.msra.mxu0 0.0
    %300 = vmatprep.subr.mxu0 0.0
    %301 = vmatpush2.msra.mxu0 0.0
    %302 = vmatprep.subr.mxu0 0.0
    %303 = vmatpush2.msra.mxu0 0.0
    %304 = vmatprep.subr.mxu0 0.0
    %305 = vmatpush2.msra.mxu0 0.0
    %306 = vmatprep.subr.mxu0 0.0
    %307 = vmatpush2.msra.mxu0 0.0
    %308 = vmatprep.subr.mxu0 0.0
    %309 = vmatpush2.msra.mxu0 0.0
    %310 = vmatprep.subr.mxu0 0.0
    %311 = vmatpush2.msra.mxu0 0.0
    %312 = vmatprep.subr.mxu0 0.0
    %313 = vmatpush2.msra.mxu0 0.0
    %314 = vmatprep.subr.mxu0 0.0
    %315 = vmatpush2.msra.mxu0 0.0
    %316 = vmatprep.subr.mxu0 0.0
    %317 = vmatpush2.msra.mxu0 0.0
    %318 = vmatprep.subr.mxu0 0.0
    %319 = vmatpush2.msra.mxu0 0.0
    %320 = vmatprep.subr.mxu0 0.0
    %321 = vmatpush2.msra.mxu0 0.0
    %322 = vmatprep.mubr.f32.mxu0 0.0
    %v323 = vand.u32 %v248, 4294901760
    %v324 = vsub.f32 %v248, %v323
    %v325 = vand.u32 %v324, 4294901760
    %v326 = vsub.f32 %v324, %v325
    %v327 = vand.u32 %v326, 4294901760
    %328 = vmatmul.mubr.f32.gmra.mxu0 %v327
    %v329 = vpop.f32.mrf.mxu0
    %v330 = vadd.f32 0.0, %v329
    %v331 = vpop.f32.mrf.mxu0
    %332 = vdwg.mxu0
    %333 = vmatprep.subr.mxu0 0.0
    %334 = vmatpush1.msra.mxu0 0.0
    %335 = vmatprep.subr.mxu0 0.0
    %336 = vmatpush1.msra.mxu0 0.0
    %337 = vmatprep.subr.mxu0 0.0
    %338 = vmatpush1.msra.mxu0 0.0
    %339 = vmatprep.subr.mxu0 0.0
    %340 = vmatpush1.msra.mxu0 0.0
    %341 = vmatprep.subr.mxu0 0.0
    %342 = vmatpush1.msra.mxu0 0.0
    %343 = vmatprep.subr.mxu0 0.0
    %344 = vmatpush1.msra.mxu0 0.0
    %345 = vmatprep.subr.mxu0 0.0
    %346 = vmatpush1.msra.mxu0 0.0
    %347 = vmatprep.subr.mxu0 0.0
    %348 = vmatpush1.msra.mxu0 0.0
    %349 = vmatprep.subr.mxu0 0.0
    %v350 = vand.u32 %v133, 4294901760
    %v351 = vsub.f32 %v133, %v350
    %v352 = vand.u32 %v351, 4294901760
    %v353 = vsub.f32 %v351, %v352
    %v354 = vand.u32 %v353, 4294901760
    %355 = vmatpush1.msra.mxu0 %v354
    %356 = vmatprep.subr.mxu0 0.0
    %v357 = vand.u32 %v132, 4294901760
    %v358 = vsub.f32 %v132, %v357
    %v359 = vand.u32 %v358, 4294901760
    %v360 = vsub.f32 %v358, %v359
    %v361 = vand.u32 %v360, 4294901760
    %362 = vmatpush1.msra.mxu0 %v361
    %363 = vmatprep.subr.mxu0 0.0
    %v364 = vand.u32 %v131, 4294901760
    %v365 = vsub.f32 %v131, %v364
    %v366 = vand.u32 %v365, 4294901760
    %v367 = vsub.f32 %v365, %v366
    %v368 = vand.u32 %v367, 4294901760
    %369 = vmatpush1.msra.mxu0 %v368
    %370 = vmatprep.subr.mxu0 0.0
    %v371 = vand.u32 %v130, 4294901760
    %v372 = vsub.f32 %v130, %v371
    %v373 = vand.u32 %v372, 4294901760
    %v374 = vsub.f32 %v372, %v373
    %v375 = vand.u32 %v374, 4294901760
    %376 = vmatpush1.msra.mxu0 %v375
    %377 = vmatprep.subr.mxu0 0.0
    %v378 = vand.u32 %v129, 4294901760
    %v379 = vsub.f32 %v129, %v378
    %v380 = vand.u32 %v379, 4294901760
    %v381 = vsub.f32 %v379, %v380
    %v382 = vand.u32 %v381, 4294901760
    %383 = vmatpush1.msra.mxu0 %v382
    %384 = vmatprep.subr.mxu0 0.0
    %v385 = vand.u32 %v128, 4294901760
    %v386 = vsub.f32 %v128, %v385
    %v387 = vand.u32 %v386, 4294901760
    %v388 = vsub.f32 %v386, %v387
    %v389 = vand.u32 %v388, 4294901760
    %390 = vmatpush1.msra.mxu0 %v389
    %391 = vmatprep.subr.mxu0 0.0
    %v392 = vand.u32 %v127, 4294901760
    %v393 = vsub.f32 %v127, %v392
    %v394 = vand.u32 %v393, 4294901760
    %v395 = vsub.f32 %v393, %v394
    %v396 = vand.u32 %v395, 4294901760
    %397 = vmatpush1.msra.mxu0 %v396
    %398 = vmatprep.subr.mxu0 0.0
    %v399 = vand.u32 %v126, 4294901760
    %v400 = vsub.f32 %v126, %v399
    %v401 = vand.u32 %v400, 4294901760
    %v402 = vsub.f32 %v400, %v401
    %v403 = vand.u32 %v402, 4294901760
    %404 = vmatpush1.msra.mxu0 %v403
    %405 = vmatprep.subr.mxu0 0.0
    %406 = vmatpush2.msra.mxu0 0.0
    %407 = vmatprep.subr.mxu0 0.0
    %408 = vmatpush2.msra.mxu0 0.0
    %409 = vmatprep.subr.mxu0 0.0
    %410 = vmatpush2.msra.mxu0 0.0
    %411 = vmatprep.subr.mxu0 0.0
    %412 = vmatpush2.msra.mxu0 0.0
    %413 = vmatprep.subr.mxu0 0.0
    %414 = vmatpush2.msra.mxu0 0.0
    %415 = vmatprep.subr.mxu0 0.0
    %416 = vmatpush2.msra.mxu0 0.0
    %417 = vmatprep.subr.mxu0 0.0
    %418 = vmatpush2.msra.mxu0 0.0
    %419 = vmatprep.subr.mxu0 0.0
    %420 = vmatpush2.msra.mxu0 0.0
    %421 = vmatprep.subr.mxu0 0.0
    %422 = vmatpush2.msra.mxu0 0.0
    %423 = vmatprep.subr.mxu0 0.0
    %424 = vmatpush2.msra.mxu0 0.0
    %425 = vmatprep.subr.mxu0 0.0
    %426 = vmatpush2.msra.mxu0 0.0
    %427 = vmatprep.subr.mxu0 0.0
    %428 = vmatpush2.msra.mxu0 0.0
    %429 = vmatprep.subr.mxu0 0.0
    %430 = vmatpush2.msra.mxu0 0.0
    %431 = vmatprep.subr.mxu0 0.0
    %432 = vmatpush2.msra.mxu0 0.0
    %433 = vmatprep.subr.mxu0 0.0
    %434 = vmatpush2.msra.mxu0 0.0
    %435 = vmatprep.subr.mxu0 0.0
    %436 = vmatpush2.msra.mxu0 0.0
    %437 = vmatprep.mubr.f32.mxu0 0.0
    %v438 = vand.u32 %v248, 4294901760
    %439 = vmatmul.mubr.f32.gmra.mxu0 %v438
    %v440 = vpop.f32.mrf.mxu0
    %v441 = vadd.f32 %v330, %v440
    %v442 = vpop.f32.mrf.mxu0
    %443 = vdwg.mxu0
    %444 = vmatprep.subr.mxu0 0.0
    %445 = vmatpush1.msra.mxu0 0.0
    %446 = vmatprep.subr.mxu0 0.0
    %447 = vmatpush1.msra.mxu0 0.0
    %448 = vmatprep.subr.mxu0 0.0
    %449 = vmatpush1.msra.mxu0 0.0
    %450 = vmatprep.subr.mxu0 0.0
    %451 = vmatpush1.msra.mxu0 0.0
    %452 = vmatprep.subr.mxu0 0.0
    %453 = vmatpush1.msra.mxu0 0.0
    %454 = vmatprep.subr.mxu0 0.0
    %455 = vmatpush1.msra.mxu0 0.0
    %456 = vmatprep.subr.mxu0 0.0
    %457 = vmatpush1.msra.mxu0 0.0
    %458 = vmatprep.subr.mxu0 0.0
    %459 = vmatpush1.msra.mxu0 0.0
    %460 = vmatprep.subr.mxu0 0.0
    %v461 = vand.u32 %v133, 4294901760
    %v462 = vsub.f32 %v133, %v461
    %463 = vmatpush1.msra.mxu0 %v462
    %464 = vmatprep.subr.mxu0 0.0
    %v465 = vand.u32 %v132, 4294901760
    %v466 = vsub.f32 %v132, %v465
    %467 = vmatpush1.msra.mxu0 %v466
    %468 = vmatprep.subr.mxu0 0.0
    %v469 = vand.u32 %v131, 4294901760
    %v470 = vsub.f32 %v131, %v469
    %471 = vmatpush1.msra.mxu0 %v470
    %472 = vmatprep.subr.mxu0 0.0
    %v473 = vand.u32 %v130, 4294901760
    %v474 = vsub.f32 %v130, %v473
    %475 = vmatpush1.msra.mxu0 %v474
    %476 = vmatprep.subr.mxu0 0.0
    %v477 = vand.u32 %v129, 4294901760
    %v478 = vsub.f32 %v129, %v477
    %479 = vmatpush1.msra.mxu0 %v478
    %480 = vmatprep.subr.mxu0 0.0
    %v481 = vand.u32 %v128, 4294901760
    %v482 = vsub.f32 %v128, %v481
    %483 = vmatpush1.msra.mxu0 %v482
    %484 = vmatprep.subr.mxu0 0.0
    %v485 = vand.u32 %v127, 4294901760
    %v486 = vsub.f32 %v127, %v485
    %487 = vmatpush1.msra.mxu0 %v486
    %488 = vmatprep.subr.mxu0 0.0
    %v489 = vand.u32 %v126, 4294901760
    %v490 = vsub.f32 %v126, %v489
    %491 = vmatpush1.msra.mxu0 %v490
    %492 = vmatprep.subr.mxu0 0.0
    %493 = vmatpush2.msra.mxu0 0.0
    %494 = vmatprep.subr.mxu0 0.0
    %495 = vmatpush2.msra.mxu0 0.0
    %496 = vmatprep.subr.mxu0 0.0
    %497 = vmatpush2.msra.mxu0 0.0
    %498 = vmatprep.subr.mxu0 0.0
    %499 = vmatpush2.msra.mxu0 0.0
    %500 = vmatprep.subr.mxu0 0.0
    %501 = vmatpush2.msra.mxu0 0.0
    %502 = vmatprep.subr.mxu0 0.0
    %503 = vmatpush2.msra.mxu0 0.0
    %504 = vmatprep.subr.mxu0 0.0
    %505 = vmatpush2.msra.mxu0 0.0
    %506 = vmatprep.subr.mxu0 0.0
    %507 = vmatpush2.msra.mxu0 0.0
    %508 = vmatprep.subr.mxu0 0.0
    %509 = vmatpush2.msra.mxu0 0.0
    %510 = vmatprep.subr.mxu0 0.0
    %511 = vmatpush2.msra.mxu0 0.0
    %512 = vmatprep.subr.mxu0 0.0
    %513 = vmatpush2.msra.mxu0 0.0
    %514 = vmatprep.subr.mxu0 0.0
    %515 = vmatpush2.msra.mxu0 0.0
    %516 = vmatprep.subr.mxu0 0.0
    %517 = vmatpush2.msra.mxu0 0.0
    %518 = vmatprep.subr.mxu0 0.0
    %519 = vmatpush2.msra.mxu0 0.0
    %520 = vmatprep.subr.mxu0 0.0
    %521 = vmatpush2.msra.mxu0 0.0
    %522 = vmatprep.subr.mxu0 0.0
    %523 = vmatpush2.msra.mxu0 0.0
    %524 = vmatprep.mubr.f32.mxu0 0.0
    %v525 = vand.u32 %v248, 4294901760
    %v526 = vsub.f32 %v248, %v525
    %527 = vmatmul.mubr.f32.gmra.mxu0 %v526
    %v528 = vpop.f32.mrf.mxu0
    %v529 = vadd.f32 %v441, %v528
    %v530 = vpop.f32.mrf.mxu0
    %531 = vdwg.mxu0
    %532 = vmatprep.subr.mxu0 0.0
    %533 = vmatpush1.msra.mxu0 0.0
    %534 = vmatprep.subr.mxu0 0.0
    %535 = vmatpush1.msra.mxu0 0.0
    %536 = vmatprep.subr.mxu0 0.0
    %537 = vmatpush1.msra.mxu0 0.0
    %538 = vmatprep.subr.mxu0 0.0
    %539 = vmatpush1.msra.mxu0 0.0
    %540 = vmatprep.subr.mxu0 0.0
    %541 = vmatpush1.msra.mxu0 0.0
    %542 = vmatprep.subr.mxu0 0.0
    %543 = vmatpush1.msra.mxu0 0.0
    %544 = vmatprep.subr.mxu0 0.0
    %545 = vmatpush1.msra.mxu0 0.0
    %546 = vmatprep.subr.mxu0 0.0
    %547 = vmatpush1.msra.mxu0 0.0
    %548 = vmatprep.subr.mxu0 0.0
    %v549 = vand.u32 %v133, 4294901760
    %550 = vmatpush1.msra.mxu0 %v549
    %551 = vmatprep.subr.mxu0 0.0
    %v552 = vand.u32 %v132, 4294901760
    %553 = vmatpush1.msra.mxu0 %v552
    %554 = vmatprep.subr.mxu0 0.0
    %v555 = vand.u32 %v131, 4294901760
    %556 = vmatpush1.msra.mxu0 %v555
    %557 = vmatprep.subr.mxu0 0.0
    %v558 = vand.u32 %v130, 4294901760
    %559 = vmatpush1.msra.mxu0 %v558
    %560 = vmatprep.subr.mxu0 0.0
    %v561 = vand.u32 %v129, 4294901760
    %562 = vmatpush1.msra.mxu0 %v561
    %563 = vmatprep.subr.mxu0 0.0
    %v564 = vand.u32 %v128, 4294901760
    %565 = vmatpush1.msra.mxu0 %v564
    %566 = vmatprep.subr.mxu0 0.0
    %v567 = vand.u32 %v127, 4294901760
    %568 = vmatpush1.msra.mxu0 %v567
    %569 = vmatprep.subr.mxu0 0.0
    %v570 = vand.u32 %v126, 4294901760
    %571 = vmatpush1.msra.mxu0 %v570
    %572 = vmatprep.subr.mxu0 0.0
    %573 = vmatpush2.msra.mxu0 0.0
    %574 = vmatprep.subr.mxu0 0.0
    %575 = vmatpush2.msra.mxu0 0.0
    %576 = vmatprep.subr.mxu0 0.0
    %577 = vmatpush2.msra.mxu0 0.0
    %578 = vmatprep.subr.mxu0 0.0
    %579 = vmatpush2.msra.mxu0 0.0
    %580 = vmatprep.subr.mxu0 0.0
    %581 = vmatpush2.msra.mxu0 0.0
    %582 = vmatprep.subr.mxu0 0.0
    %583 = vmatpush2.msra.mxu0 0.0
    %584 = vmatprep.subr.mxu0 0.0
    %585 = vmatpush2.msra.mxu0 0.0
    %586 = vmatprep.subr.mxu0 0.0
    %587 = vmatpush2.msra.mxu0 0.0
    %588 = vmatprep.subr.mxu0 0.0
    %589 = vmatpush2.msra.mxu0 0.0
    %590 = vmatprep.subr.mxu0 0.0
    %591 = vmatpush2.msra.mxu0 0.0
    %592 = vmatprep.subr.mxu0 0.0
    %593 = vmatpush2.msra.mxu0 0.0
    %594 = vmatprep.subr.mxu0 0.0
    %595 = vmatpush2.msra.mxu0 0.0
    %596 = vmatprep.subr.mxu0 0.0
    %597 = vmatpush2.msra.mxu0 0.0
    %598 = vmatprep.subr.mxu0 0.0
    %599 = vmatpush2.msra.mxu0 0.0
    %600 = vmatprep.subr.mxu0 0.0
    %601 = vmatpush2.msra.mxu0 0.0
    %602 = vmatprep.subr.mxu0 0.0
    %603 = vmatpush2.msra.mxu0 0.0
    %604 = vmatprep.mubr.f32.mxu0 0.0
    %v605 = vand.u32 %v248, 4294901760
    %v606 = vsub.f32 %v248, %v605
    %v607 = vand.u32 %v606, 4294901760
    %608 = vmatmul.mubr.f32.gmra.mxu0 %v607
    %v609 = vpop.f32.mrf.mxu0
    %v610 = vadd.f32 %v529, %v609
    %v611 = vpop.f32.mrf.mxu0
    %612 = vdwg.mxu0
    %613 = vmatprep.subr.mxu0 0.0
    %614 = vmatpush1.msra.mxu0 0.0
    %615 = vmatprep.subr.mxu0 0.0
    %616 = vmatpush1.msra.mxu0 0.0
    %617 = vmatprep.subr.mxu0 0.0
    %618 = vmatpush1.msra.mxu0 0.0
    %619 = vmatprep.subr.mxu0 0.0
    %620 = vmatpush1.msra.mxu0 0.0
    %621 = vmatprep.subr.mxu0 0.0
    %622 = vmatpush1.msra.mxu0 0.0
    %623 = vmatprep.subr.mxu0 0.0
    %624 = vmatpush1.msra.mxu0 0.0
    %625 = vmatprep.subr.mxu0 0.0
    %626 = vmatpush1.msra.mxu0 0.0
    %627 = vmatprep.subr.mxu0 0.0
    %628 = vmatpush1.msra.mxu0 0.0
    %629 = vmatprep.subr.mxu0 0.0
    %v630 = vand.u32 %v133, 4294901760
    %v631 = vsub.f32 %v133, %v630
    %v632 = vand.u32 %v631, 4294901760
    %633 = vmatpush1.msra.mxu0 %v632
    %634 = vmatprep.subr.mxu0 0.0
    %v635 = vand.u32 %v132, 4294901760
    %v636 = vsub.f32 %v132, %v635
    %v637 = vand.u32 %v636, 4294901760
    %638 = vmatpush1.msra.mxu0 %v637
    %639 = vmatprep.subr.mxu0 0.0
    %v640 = vand.u32 %v131, 4294901760
    %v641 = vsub.f32 %v131, %v640
    %v642 = vand.u32 %v641, 4294901760
    %643 = vmatpush1.msra.mxu0 %v642
    %644 = vmatprep.subr.mxu0 0.0
    %v645 = vand.u32 %v130, 4294901760
    %v646 = vsub.f32 %v130, %v645
    %v647 = vand.u32 %v646, 4294901760
    %648 = vmatpush1.msra.mxu0 %v647
    %649 = vmatprep.subr.mxu0 0.0
    %v650 = vand.u32 %v129, 4294901760
    %v651 = vsub.f32 %v129, %v650
    %v652 = vand.u32 %v651, 4294901760
    %653 = vmatpush1.msra.mxu0 %v652
    %654 = vmatprep.subr.mxu0 0.0
    %v655 = vand.u32 %v128, 4294901760
    %v656 = vsub.f32 %v128, %v655
    %v657 = vand.u32 %v656, 4294901760
    %658 = vmatpush1.msra.mxu0 %v657
    %659 = vmatprep.subr.mxu0 0.0
    %v660 = vand.u32 %v127, 4294901760
    %v661 = vsub.f32 %v127, %v660
    %v662 = vand.u32 %v661, 4294901760
    %663 = vmatpush1.msra.mxu0 %v662
    %664 = vmatprep.subr.mxu0 0.0
    %v665 = vand.u32 %v126, 4294901760
    %v666 = vsub.f32 %v126, %v665
    %v667 = vand.u32 %v666, 4294901760
    %668 = vmatpush1.msra.mxu0 %v667
    %669 = vmatprep.subr.mxu0 0.0
    %670 = vmatpush2.msra.mxu0 0.0
    %671 = vmatprep.subr.mxu0 0.0
    %672 = vmatpush2.msra.mxu0 0.0
    %673 = vmatprep.subr.mxu0 0.0
    %674 = vmatpush2.msra.mxu0 0.0
    %675 = vmatprep.subr.mxu0 0.0
    %676 = vmatpush2.msra.mxu0 0.0
    %677 = vmatprep.subr.mxu0 0.0
    %678 = vmatpush2.msra.mxu0 0.0
    %679 = vmatprep.subr.mxu0 0.0
    %680 = vmatpush2.msra.mxu0 0.0
    %681 = vmatprep.subr.mxu0 0.0
    %682 = vmatpush2.msra.mxu0 0.0
    %683 = vmatprep.subr.mxu0 0.0
    %684 = vmatpush2.msra.mxu0 0.0
    %685 = vmatprep.subr.mxu0 0.0
    %686 = vmatpush2.msra.mxu0 0.0
    %687 = vmatprep.subr.mxu0 0.0
    %688 = vmatpush2.msra.mxu0 0.0
    %689 = vmatprep.subr.mxu0 0.0
    %690 = vmatpush2.msra.mxu0 0.0
    %691 = vmatprep.subr.mxu0 0.0
    %692 = vmatpush2.msra.mxu0 0.0
    %693 = vmatprep.subr.mxu0 0.0
    %694 = vmatpush2.msra.mxu0 0.0
    %695 = vmatprep.subr.mxu0 0.0
    %696 = vmatpush2.msra.mxu0 0.0
    %697 = vmatprep.subr.mxu0 0.0
    %698 = vmatpush2.msra.mxu0 0.0
    %699 = vmatprep.subr.mxu0 0.0
    %700 = vmatpush2.msra.mxu0 0.0
    %701 = vmatprep.mubr.f32.mxu0 0.0
    %v702 = vand.u32 %v248, 4294901760
    %703 = vmatmul.mubr.f32.gmra.mxu0 %v702
    %v704 = vpop.f32.mrf.mxu0
    %v705 = vadd.f32 %v610, %v704
    %v706 = vpop.f32.mrf.mxu0
    %707 = vdwg.mxu0
    %708 = vmatprep.subr.mxu0 0.0
    %709 = vmatpush1.msra.mxu0 0.0
    %710 = vmatprep.subr.mxu0 0.0
    %711 = vmatpush1.msra.mxu0 0.0
    %712 = vmatprep.subr.mxu0 0.0
    %713 = vmatpush1.msra.mxu0 0.0
    %714 = vmatprep.subr.mxu0 0.0
    %715 = vmatpush1.msra.mxu0 0.0
    %716 = vmatprep.subr.mxu0 0.0
    %717 = vmatpush1.msra.mxu0 0.0
    %718 = vmatprep.subr.mxu0 0.0
    %719 = vmatpush1.msra.mxu0 0.0
    %720 = vmatprep.subr.mxu0 0.0
    %721 = vmatpush1.msra.mxu0 0.0
    %722 = vmatprep.subr.mxu0 0.0
    %723 = vmatpush1.msra.mxu0 0.0
    %724 = vmatprep.subr.mxu0 0.0
    %v725 = vand.u32 %v133, 4294901760
    %726 = vmatpush1.msra.mxu0 %v725
    %727 = vmatprep.subr.mxu0 0.0
    %v728 = vand.u32 %v132, 4294901760
    %729 = vmatpush1.msra.mxu0 %v728
    %730 = vmatprep.subr.mxu0 0.0
    %v731 = vand.u32 %v131, 4294901760
    %732 = vmatpush1.msra.mxu0 %v731
    %733 = vmatprep.subr.mxu0 0.0
    %v734 = vand.u32 %v130, 4294901760
    %735 = vmatpush1.msra.mxu0 %v734
    %736 = vmatprep.subr.mxu0 0.0
    %v737 = vand.u32 %v129, 4294901760
    %738 = vmatpush1.msra.mxu0 %v737
    %739 = vmatprep.subr.mxu0 0.0
    %v740 = vand.u32 %v128, 4294901760
    %741 = vmatpush1.msra.mxu0 %v740
    %742 = vmatprep.subr.mxu0 0.0
    %v743 = vand.u32 %v127, 4294901760
    %744 = vmatpush1.msra.mxu0 %v743
    %745 = vmatprep.subr.mxu0 0.0
    %v746 = vand.u32 %v126, 4294901760
    %747 = vmatpush1.msra.mxu0 %v746
    %748 = vmatprep.subr.mxu0 0.0
    %749 = vmatpush2.msra.mxu0 0.0
    %750 = vmatprep.subr.mxu0 0.0
    %751 = vmatpush2.msra.mxu0 0.0
    %752 = vmatprep.subr.mxu0 0.0
    %753 = vmatpush2.msra.mxu0 0.0
    %754 = vmatprep.subr.mxu0 0.0
    %755 = vmatpush2.msra.mxu0 0.0
    %756 = vmatprep.subr.mxu0 0.0
    %757 = vmatpush2.msra.mxu0 0.0
    %758 = vmatprep.subr.mxu0 0.0
    %759 = vmatpush2.msra.mxu0 0.0
    %760 = vmatprep.subr.mxu0 0.0
    %761 = vmatpush2.msra.mxu0 0.0
    %762 = vmatprep.subr.mxu0 0.0
    %763 = vmatpush2.msra.mxu0 0.0
    %764 = vmatprep.subr.mxu0 0.0
    %765 = vmatpush2.msra.mxu0 0.0
    %766 = vmatprep.subr.mxu0 0.0
    %767 = vmatpush2.msra.mxu0 0.0
    %768 = vmatprep.subr.mxu0 0.0
    %769 = vmatpush2.msra.mxu0 0.0
    %770 = vmatprep.subr.mxu0 0.0
    %771 = vmatpush2.msra.mxu0 0.0
    %772 = vmatprep.subr.mxu0 0.0
    %773 = vmatpush2.msra.mxu0 0.0
    %774 = vmatprep.subr.mxu0 0.0
    %775 = vmatpush2.msra.mxu0 0.0
    %776 = vmatprep.subr.mxu0 0.0
    %777 = vmatpush2.msra.mxu0 0.0
    %778 = vmatprep.subr.mxu0 0.0
    %779 = vmatpush2.msra.mxu0 0.0
    %780 = vmatprep.mubr.f32.mxu0 0.0
    %v781 = vand.u32 %v248, 4294901760
    %782 = vmatmul.mubr.f32.gmra.mxu0 %v781
    %v783 = vpop.f32.mrf.mxu0
    %v784 = vadd.f32 %v705, %v783
    %v785 = vpop.f32.mrf.mxu0
    %786 = vdwg.mxu0
    %v787 = vxor.u32 %v784, 2147483648
    %v788 = vmul.f32 %v787, 1.442695
    %v789 = vpow.pop %v788
    %v790 = vadd.f32 %v789, 1.0
    %v791 = vrcp.pop %v790
    %v792 = vmul.f32 1.0, %v791
    %v793 = vmul.f32 %v784, %v792
    %vm794 = vcmask 31744
    %v796 = vsel %vm794, %v793, 0
    %vm798 = vcmask 1043456
    %v800 = vsel %vm798, %v134, 0
    %802 = vmatprep.subr.mxu0 0.0
    %803 = vmatpush1.msra.mxu0 0.0
    %804 = vmatprep.subr.mxu0 0.0
    %805 = vmatpush1.msra.mxu0 0.0
    %806 = vmatprep.subr.mxu0 0.0
    %807 = vmatpush1.msra.mxu0 0.0
    %808 = vmatprep.subr.mxu0 0.0
    %809 = vmatpush1.msra.mxu0 0.0
    %810 = vmatprep.subr.mxu0 0.0
    %811 = vmatpush1.msra.mxu0 0.0
    %812 = vmatprep.subr.mxu0 0.0
    %813 = vmatpush1.msra.mxu0 0.0
    %814 = vmatprep.subr.mxu0 0.0
    %815 = vmatpush1.msra.mxu0 0.0
    %816 = vmatprep.subr.mxu0 0.0
    %817 = vmatpush1.msra.mxu0 0.0
    %818 = vmatprep.subr.mxu0 0.0
    %819 = vmatpush1.msra.mxu0 0.0
    %820 = vmatprep.subr.mxu0 0.0
    %821 = vmatpush1.msra.mxu0 0.0
    %822 = vmatprep.subr.mxu0 0.0
    %823 = vmatpush1.msra.mxu0 0.0
    %824 = vmatprep.subr.mxu0 0.0
    %825 = vmatpush1.msra.mxu0 0.0
    %826 = vmatprep.subr.mxu0 0.0
    %827 = vmatpush1.msra.mxu0 0.0
    %828 = vmatprep.subr.mxu0 0.0
    %829 = vmatpush1.msra.mxu0 0.0
    %830 = vmatprep.subr.mxu0 0.0
    %831 = vmatpush1.msra.mxu0 0.0
    %832 = vmatprep.subr.mxu0 0.0
    %v833 = vand.u32 %v800, 4294901760
    %834 = vmatpush1.msra.mxu0 %v833
    %835 = vmatprep.subr.mxu0 0.0
    %836 = vmatpush2.msra.mxu0 0.0
    %837 = vmatprep.subr.mxu0 0.0
    %838 = vmatpush2.msra.mxu0 0.0
    %839 = vmatprep.subr.mxu0 0.0
    %840 = vmatpush2.msra.mxu0 0.0
    %841 = vmatprep.subr.mxu0 0.0
    %842 = vmatpush2.msra.mxu0 0.0
    %843 = vmatprep.subr.mxu0 0.0
    %844 = vmatpush2.msra.mxu0 0.0
    %845 = vmatprep.subr.mxu0 0.0
    %846 = vmatpush2.msra.mxu0 0.0
    %847 = vmatprep.subr.mxu0 0.0
    %848 = vmatpush2.msra.mxu0 0.0
    %849 = vmatprep.subr.mxu0 0.0
    %850 = vmatpush2.msra.mxu0 0.0
    %851 = vmatprep.subr.mxu0 0.0
    %852 = vmatpush2.msra.mxu0 0.0
    %853 = vmatprep.subr.mxu0 0.0
    %854 = vmatpush2.msra.mxu0 0.0
    %855 = vmatprep.subr.mxu0 0.0
    %856 = vmatpush2.msra.mxu0 0.0
    %857 = vmatprep.subr.mxu0 0.0
    %858 = vmatpush2.msra.mxu0 0.0
    %859 = vmatprep.subr.mxu0 0.0
    %860 = vmatpush2.msra.mxu0 0.0
    %861 = vmatprep.subr.mxu0 0.0
    %862 = vmatpush2.msra.mxu0 0.0
    %863 = vmatprep.subr.mxu0 0.0
    %864 = vmatpush2.msra.mxu0 0.0
    %865 = vmatprep.subr.mxu0 0.0
    %866 = vmatpush2.msra.mxu0 0.0
    %867 = vmatprep.mubr.f32.mxu0 0.0
    %v868 = vand.u32 %v796, 4294901760
    %v869 = vsub.f32 %v796, %v868
    %v870 = vand.u32 %v869, 4294901760
    %v871 = vsub.f32 %v869, %v870
    %v872 = vand.u32 %v871, 4294901760
    %873 = vmatmul.mubr.f32.gmra.mxu0 %v872
    %v874 = vpop.f32.mrf.mxu0
    %v875 = vadd.f32 0.0, %v874
    %v876 = vpop.f32.mrf.mxu0
    %877 = vdwg.mxu0
    %878 = vmatprep.subr.mxu0 0.0
    %879 = vmatpush1.msra.mxu0 0.0
    %880 = vmatprep.subr.mxu0 0.0
    %881 = vmatpush1.msra.mxu0 0.0
    %882 = vmatprep.subr.mxu0 0.0
    %883 = vmatpush1.msra.mxu0 0.0
    %884 = vmatprep.subr.mxu0 0.0
    %885 = vmatpush1.msra.mxu0 0.0
    %886 = vmatprep.subr.mxu0 0.0
    %887 = vmatpush1.msra.mxu0 0.0
    %888 = vmatprep.subr.mxu0 0.0
    %889 = vmatpush1.msra.mxu0 0.0
    %890 = vmatprep.subr.mxu0 0.0
    %891 = vmatpush1.msra.mxu0 0.0
    %892 = vmatprep.subr.mxu0 0.0
    %893 = vmatpush1.msra.mxu0 0.0
    %894 = vmatprep.subr.mxu0 0.0
    %895 = vmatpush1.msra.mxu0 0.0
    %896 = vmatprep.subr.mxu0 0.0
    %897 = vmatpush1.msra.mxu0 0.0
    %898 = vmatprep.subr.mxu0 0.0
    %899 = vmatpush1.msra.mxu0 0.0
    %900 = vmatprep.subr.mxu0 0.0
    %901 = vmatpush1.msra.mxu0 0.0
    %902 = vmatprep.subr.mxu0 0.0
    %903 = vmatpush1.msra.mxu0 0.0
    %904 = vmatprep.subr.mxu0 0.0
    %905 = vmatpush1.msra.mxu0 0.0
    %906 = vmatprep.subr.mxu0 0.0
    %907 = vmatpush1.msra.mxu0 0.0
    %908 = vmatprep.subr.mxu0 0.0
    %v909 = vand.u32 %v800, 4294901760
    %v910 = vsub.f32 %v800, %v909
    %v911 = vand.u32 %v910, 4294901760
    %v912 = vsub.f32 %v910, %v911
    %v913 = vand.u32 %v912, 4294901760
    %914 = vmatpush1.msra.mxu0 %v913
    %915 = vmatprep.subr.mxu0 0.0
    %916 = vmatpush2.msra.mxu0 0.0
    %917 = vmatprep.subr.mxu0 0.0
    %918 = vmatpush2.msra.mxu0 0.0
    %919 = vmatprep.subr.mxu0 0.0
    %920 = vmatpush2.msra.mxu0 0.0
    %921 = vmatprep.subr.mxu0 0.0
    %922 = vmatpush2.msra.mxu0 0.0
    %923 = vmatprep.subr.mxu0 0.0
    %924 = vmatpush2.msra.mxu0 0.0
    %925 = vmatprep.subr.mxu0 0.0
    %926 = vmatpush2.msra.mxu0 0.0
    %927 = vmatprep.subr.mxu0 0.0
    %928 = vmatpush2.msra.mxu0 0.0
    %929 = vmatprep.subr.mxu0 0.0
    %930 = vmatpush2.msra.mxu0 0.0
    %931 = vmatprep.subr.mxu0 0.0
    %932 = vmatpush2.msra.mxu0 0.0
    %933 = vmatprep.subr.mxu0 0.0
    %934 = vmatpush2.msra.mxu0 0.0
    %935 = vmatprep.subr.mxu0 0.0
    %936 = vmatpush2.msra.mxu0 0.0
    %937 = vmatprep.subr.mxu0 0.0
    %938 = vmatpush2.msra.mxu0 0.0
    %939 = vmatprep.subr.mxu0 0.0
    %940 = vmatpush2.msra.mxu0 0.0
    %941 = vmatprep.subr.mxu0 0.0
    %942 = vmatpush2.msra.mxu0 0.0
    %943 = vmatprep.subr.mxu0 0.0
    %944 = vmatpush2.msra.mxu0 0.0
    %945 = vmatprep.subr.mxu0 0.0
    %946 = vmatpush2.msra.mxu0 0.0
    %947 = vmatprep.mubr.f32.mxu0 0.0
    %v948 = vand.u32 %v796, 4294901760
    %949 = vmatmul.mubr.f32.gmra.mxu0 %v948
    %v950 = vpop.f32.mrf.mxu0
    %v951 = vadd.f32 %v875, %v950
    %v952 = vpop.f32.mrf.mxu0
    %953 = vdwg.mxu0
    %954 = vmatprep.subr.mxu0 0.0
    %955 = vmatpush1.msra.mxu0 0.0
    %956 = vmatprep.subr.mxu0 0.0
    %957 = vmatpush1.msra.mxu0 0.0
    %958 = vmatprep.subr.mxu0 0.0
    %959 = vmatpush1.msra.mxu0 0.0
    %960 = vmatprep.subr.mxu0 0.0
    %961 = vmatpush1.msra.mxu0 0.0
    %962 = vmatprep.subr.mxu0 0.0
    %963 = vmatpush1.msra.mxu0 0.0
    %964 = vmatprep.subr.mxu0 0.0
    %965 = vmatpush1.msra.mxu0 0.0
    %966 = vmatprep.subr.mxu0 0.0
    %967 = vmatpush1.msra.mxu0 0.0
    %968 = vmatprep.subr.mxu0 0.0
    %969 = vmatpush1.msra.mxu0 0.0
    %970 = vmatprep.subr.mxu0 0.0
    %971 = vmatpush1.msra.mxu0 0.0
    %972 = vmatprep.subr.mxu0 0.0
    %973 = vmatpush1.msra.mxu0 0.0
    %974 = vmatprep.subr.mxu0 0.0
    %975 = vmatpush1.msra.mxu0 0.0
    %976 = vmatprep.subr.mxu0 0.0
    %977 = vmatpush1.msra.mxu0 0.0
    %978 = vmatprep.subr.mxu0 0.0
    %979 = vmatpush1.msra.mxu0 0.0
    %980 = vmatprep.subr.mxu0 0.0
    %981 = vmatpush1.msra.mxu0 0.0
    %982 = vmatprep.subr.mxu0 0.0
    %983 = vmatpush1.msra.mxu0 0.0
    %984 = vmatprep.subr.mxu0 0.0
    %v985 = vand.u32 %v800, 4294901760
    %v986 = vsub.f32 %v800, %v985
    %987 = vmatpush1.msra.mxu0 %v986
    %988 = vmatprep.subr.mxu0 0.0
    %989 = vmatpush2.msra.mxu0 0.0
    %990 = vmatprep.subr.mxu0 0.0
    %991 = vmatpush2.msra.mxu0 0.0
    %992 = vmatprep.subr.mxu0 0.0
    %993 = vmatpush2.msra.mxu0 0.0
    %994 = vmatprep.subr.mxu0 0.0
    %995 = vmatpush2.msra.mxu0 0.0
    %996 = vmatprep.subr.mxu0 0.0
    %997 = vmatpush2.msra.mxu0 0.0
    %998 = vmatprep.subr.mxu0 0.0
    %999 = vmatpush2.msra.mxu0 0.0
    %1000 = vmatprep.subr.mxu0 0.0
    %1001 = vmatpush2.msra.mxu0 0.0
    %1002 = vmatprep.subr.mxu0 0.0
    %1003 = vmatpush2.msra.mxu0 0.0
    %1004 = vmatprep.subr.mxu0 0.0
    %1005 = vmatpush2.msra.mxu0 0.0
    %1006 = vmatprep.subr.mxu0 0.0
    %1007 = vmatpush2.msra.mxu0 0.0
    %1008 = vmatprep.subr.mxu0 0.0
    %1009 = vmatpush2.msra.mxu0 0.0
    %1010 = vmatprep.subr.mxu0 0.0
    %1011 = vmatpush2.msra.mxu0 0.0
    %1012 = vmatprep.subr.mxu0 0.0
    %1013 = vmatpush2.msra.mxu0 0.0
    %1014 = vmatprep.subr.mxu0 0.0
    %1015 = vmatpush2.msra.mxu0 0.0
    %1016 = vmatprep.subr.mxu0 0.0
    %1017 = vmatpush2.msra.mxu0 0.0
    %1018 = vmatprep.subr.mxu0 0.0
    %1019 = vmatpush2.msra.mxu0 0.0
    %1020 = vmatprep.mubr.f32.mxu0 0.0
    %v1021 = vand.u32 %v796, 4294901760
    %v1022 = vsub.f32 %v796, %v1021
    %1023 = vmatmul.mubr.f32.gmra.mxu0 %v1022
    %v1024 = vpop.f32.mrf.mxu0
    %v1025 = vadd.f32 %v951, %v1024
    %v1026 = vpop.f32.mrf.mxu0
    %1027 = vdwg.mxu0
    %1028 = vmatprep.subr.mxu0 0.0
    %1029 = vmatpush1.msra.mxu0 0.0
    %1030 = vmatprep.subr.mxu0 0.0
    %1031 = vmatpush1.msra.mxu0 0.0
    %1032 = vmatprep.subr.mxu0 0.0
    %1033 = vmatpush1.msra.mxu0 0.0
    %1034 = vmatprep.subr.mxu0 0.0
    %1035 = vmatpush1.msra.mxu0 0.0
    %1036 = vmatprep.subr.mxu0 0.0
    %1037 = vmatpush1.msra.mxu0 0.0
    %1038 = vmatprep.subr.mxu0 0.0
    %1039 = vmatpush1.msra.mxu0 0.0
    %1040 = vmatprep.subr.mxu0 0.0
    %1041 = vmatpush1.msra.mxu0 0.0
    %1042 = vmatprep.subr.mxu0 0.0
    %1043 = vmatpush1.msra.mxu0 0.0
    %1044 = vmatprep.subr.mxu0 0.0
    %1045 = vmatpush1.msra.mxu0 0.0
    %1046 = vmatprep.subr.mxu0 0.0
    %1047 = vmatpush1.msra.mxu0 0.0
    %1048 = vmatprep.subr.mxu0 0.0
    %1049 = vmatpush1.msra.mxu0 0.0
    %1050 = vmatprep.subr.mxu0 0.0
    %1051 = vmatpush1.msra.mxu0 0.0
    %1052 = vmatprep.subr.mxu0 0.0
    %1053 = vmatpush1.msra.mxu0 0.0
    %1054 = vmatprep.subr.mxu0 0.0
    %1055 = vmatpush1.msra.mxu0 0.0
    %1056 = vmatprep.subr.mxu0 0.0
    %1057 = vmatpush1.msra.mxu0 0.0
    %1058 = vmatprep.subr.mxu0 0.0
    %v1059 = vand.u32 %v800, 4294901760
    %1060 = vmatpush1.msra.mxu0 %v1059
    %1061 = vmatprep.subr.mxu0 0.0
    %1062 = vmatpush2.msra.mxu0 0.0
    %1063 = vmatprep.subr.mxu0 0.0
    %1064 = vmatpush2.msra.mxu0 0.0
    %1065 = vmatprep.subr.mxu0 0.0
    %1066 = vmatpush2.msra.mxu0 0.0
    %1067 = vmatprep.subr.mxu0 0.0
    %1068 = vmatpush2.msra.mxu0 0.0
    %1069 = vmatprep.subr.mxu0 0.0
    %1070 = vmatpush2.msra.mxu0 0.0
    %1071 = vmatprep.subr.mxu0 0.0
    %1072 = vmatpush2.msra.mxu0 0.0
    %1073 = vmatprep.subr.mxu0 0.0
    %1074 = vmatpush2.msra.mxu0 0.0
    %1075 = vmatprep.subr.mxu0 0.0
    %1076 = vmatpush2.msra.mxu0 0.0
    %1077 = vmatprep.subr.mxu0 0.0
    %1078 = vmatpush2.msra.mxu0 0.0
    %1079 = vmatprep.subr.mxu0 0.0
    %1080 = vmatpush2.msra.mxu0 0.0
    %1081 = vmatprep.subr.mxu0 0.0
    %1082 = vmatpush2.msra.mxu0 0.0
    %1083 = vmatprep.subr.mxu0 0.0
    %1084 = vmatpush2.msra.mxu0 0.0
    %1085 = vmatprep.subr.mxu0 0.0
    %1086 = vmatpush2.msra.mxu0 0.0
    %1087 = vmatprep.subr.mxu0 0.0
    %1088 = vmatpush2.msra.mxu0 0.0
    %1089 = vmatprep.subr.mxu0 0.0
    %1090 = vmatpush2.msra.mxu0 0.0
    %1091 = vmatprep.subr.mxu0 0.0
    %1092 = vmatpush2.msra.mxu0 0.0
    %1093 = vmatprep.mubr.f32.mxu0 0.0
    %v1094 = vand.u32 %v796, 4294901760
    %v1095 = vsub.f32 %v796, %v1094
    %v1096 = vand.u32 %v1095, 4294901760
    %1097 = vmatmul.mubr.f32.gmra.mxu0 %v1096
    %v1098 = vpop.f32.mrf.mxu0
    %v1099 = vadd.f32 %v1025, %v1098
    %v1100 = vpop.f32.mrf.mxu0
    %1101 = vdwg.mxu0
    %1102 = vmatprep.subr.mxu0 0.0
    %1103 = vmatpush1.msra.mxu0 0.0
    %1104 = vmatprep.subr.mxu0 0.0
    %1105 = vmatpush1.msra.mxu0 0.0
    %1106 = vmatprep.subr.mxu0 0.0
    %1107 = vmatpush1.msra.mxu0 0.0
    %1108 = vmatprep.subr.mxu0 0.0
    %1109 = vmatpush1.msra.mxu0 0.0
    %1110 = vmatprep.subr.mxu0 0.0
    %1111 = vmatpush1.msra.mxu0 0.0
    %1112 = vmatprep.subr.mxu0 0.0
    %1113 = vmatpush1.msra.mxu0 0.0
    %1114 = vmatprep.subr.mxu0 0.0
    %1115 = vmatpush1.msra.mxu0 0.0
    %1116 = vmatprep.subr.mxu0 0.0
    %1117 = vmatpush1.msra.mxu0 0.0
    %1118 = vmatprep.subr.mxu0 0.0
    %1119 = vmatpush1.msra.mxu0 0.0
    %1120 = vmatprep.subr.mxu0 0.0
    %1121 = vmatpush1.msra.mxu0 0.0
    %1122 = vmatprep.subr.mxu0 0.0
    %1123 = vmatpush1.msra.mxu0 0.0
    %1124 = vmatprep.subr.mxu0 0.0
    %1125 = vmatpush1.msra.mxu0 0.0
    %1126 = vmatprep.subr.mxu0 0.0
    %1127 = vmatpush1.msra.mxu0 0.0
    %1128 = vmatprep.subr.mxu0 0.0
    %1129 = vmatpush1.msra.mxu0 0.0
    %1130 = vmatprep.subr.mxu0 0.0
    %1131 = vmatpush1.msra.mxu0 0.0
    %1132 = vmatprep.subr.mxu0 0.0
    %v1133 = vand.u32 %v800, 4294901760
    %v1134 = vsub.f32 %v800, %v1133
    %v1135 = vand.u32 %v1134, 4294901760
    %1136 = vmatpush1.msra.mxu0 %v1135
    %1137 = vmatprep.subr.mxu0 0.0
    %1138 = vmatpush2.msra.mxu0 0.0
    %1139 = vmatprep.subr.mxu0 0.0
    %1140 = vmatpush2.msra.mxu0 0.0
    %1141 = vmatprep.subr.mxu0 0.0
    %1142 = vmatpush2.msra.mxu0 0.0
    %1143 = vmatprep.subr.mxu0 0.0
    %1144 = vmatpush2.msra.mxu0 0.0
    %1145 = vmatprep.subr.mxu0 0.0
    %1146 = vmatpush2.msra.mxu0 0.0
    %1147 = vmatprep.subr.mxu0 0.0
    %1148 = vmatpush2.msra.mxu0 0.0
    %1149 = vmatprep.subr.mxu0 0.0
    %1150 = vmatpush2.msra.mxu0 0.0
    %1151 = vmatprep.subr.mxu0 0.0
    %1152 = vmatpush2.msra.mxu0 0.0
    %1153 = vmatprep.subr.mxu0 0.0
    %1154 = vmatpush2.msra.mxu0 0.0
    %1155 = vmatprep.subr.mxu0 0.0
    %1156 = vmatpush2.msra.mxu0 0.0
    %1157 = vmatprep.subr.mxu0 0.0
    %1158 = vmatpush2.msra.mxu0 0.0
    %1159 = vmatprep.subr.mxu0 0.0
    %1160 = vmatpush2.msra.mxu0 0.0
    %1161 = vmatprep.subr.mxu0 0.0
    %1162 = vmatpush2.msra.mxu0 0.0
    %1163 = vmatprep.subr.mxu0 0.0
    %1164 = vmatpush2.msra.mxu0 0.0
    %1165 = vmatprep.subr.mxu0 0.0
    %1166 = vmatpush2.msra.mxu0 0.0
    %1167 = vmatprep.subr.mxu0 0.0
    %1168 = vmatpush2.msra.mxu0 0.0
    %1169 = vmatprep.mubr.f32.mxu0 0.0
    %v1170 = vand.u32 %v796, 4294901760
    %1171 = vmatmul.mubr.f32.gmra.mxu0 %v1170
    %v1172 = vpop.f32.mrf.mxu0
    %v1173 = vadd.f32 %v1099, %v1172
    %v1174 = vpop.f32.mrf.mxu0
    %1175 = vdwg.mxu0
    %1176 = vmatprep.subr.mxu0 0.0
    %1177 = vmatpush1.msra.mxu0 0.0
    %1178 = vmatprep.subr.mxu0 0.0
    %1179 = vmatpush1.msra.mxu0 0.0
    %1180 = vmatprep.subr.mxu0 0.0
    %1181 = vmatpush1.msra.mxu0 0.0
    %1182 = vmatprep.subr.mxu0 0.0
    %1183 = vmatpush1.msra.mxu0 0.0
    %1184 = vmatprep.subr.mxu0 0.0
    %1185 = vmatpush1.msra.mxu0 0.0
    %1186 = vmatprep.subr.mxu0 0.0
    %1187 = vmatpush1.msra.mxu0 0.0
    %1188 = vmatprep.subr.mxu0 0.0
    %1189 = vmatpush1.msra.mxu0 0.0
    %1190 = vmatprep.subr.mxu0 0.0
    %1191 = vmatpush1.msra.mxu0 0.0
    %1192 = vmatprep.subr.mxu0 0.0
    %1193 = vmatpush1.msra.mxu0 0.0
    %1194 = vmatprep.subr.mxu0 0.0
    %1195 = vmatpush1.msra.mxu0 0.0
    %1196 = vmatprep.subr.mxu0 0.0
    %1197 = vmatpush1.msra.mxu0 0.0
    %1198 = vmatprep.subr.mxu0 0.0
    %1199 = vmatpush1.msra.mxu0 0.0
    %1200 = vmatprep.subr.mxu0 0.0
    %1201 = vmatpush1.msra.mxu0 0.0
    %1202 = vmatprep.subr.mxu0 0.0
    %1203 = vmatpush1.msra.mxu0 0.0
    %1204 = vmatprep.subr.mxu0 0.0
    %1205 = vmatpush1.msra.mxu0 0.0
    %1206 = vmatprep.subr.mxu0 0.0
    %v1207 = vand.u32 %v800, 4294901760
    %1208 = vmatpush1.msra.mxu0 %v1207
    %1209 = vmatprep.subr.mxu0 0.0
    %1210 = vmatpush2.msra.mxu0 0.0
    %1211 = vmatprep.subr.mxu0 0.0
    %1212 = vmatpush2.msra.mxu0 0.0
    %1213 = vmatprep.subr.mxu0 0.0
    %1214 = vmatpush2.msra.mxu0 0.0
    %1215 = vmatprep.subr.mxu0 0.0
    %1216 = vmatpush2.msra.mxu0 0.0
    %1217 = vmatprep.subr.mxu0 0.0
    %1218 = vmatpush2.msra.mxu0 0.0
    %1219 = vmatprep.subr.mxu0 0.0
    %1220 = vmatpush2.msra.mxu0 0.0
    %1221 = vmatprep.subr.mxu0 0.0
    %1222 = vmatpush2.msra.mxu0 0.0
    %1223 = vmatprep.subr.mxu0 0.0
    %1224 = vmatpush2.msra.mxu0 0.0
    %1225 = vmatprep.subr.mxu0 0.0
    %1226 = vmatpush2.msra.mxu0 0.0
    %1227 = vmatprep.subr.mxu0 0.0
    %1228 = vmatpush2.msra.mxu0 0.0
    %1229 = vmatprep.subr.mxu0 0.0
    %1230 = vmatpush2.msra.mxu0 0.0
    %1231 = vmatprep.subr.mxu0 0.0
    %1232 = vmatpush2.msra.mxu0 0.0
    %1233 = vmatprep.subr.mxu0 0.0
    %1234 = vmatpush2.msra.mxu0 0.0
    %1235 = vmatprep.subr.mxu0 0.0
    %1236 = vmatpush2.msra.mxu0 0.0
    %1237 = vmatprep.subr.mxu0 0.0
    %1238 = vmatpush2.msra.mxu0 0.0
    %1239 = vmatprep.subr.mxu0 0.0
    %1240 = vmatpush2.msra.mxu0 0.0
    %1241 = vmatprep.mubr.f32.mxu0 0.0
    %v1242 = vand.u32 %v796, 4294901760
    %1243 = vmatmul.mubr.f32.gmra.mxu0 %v1242
    %v1244 = vpop.f32.mrf.mxu0
    %v1245 = vadd.f32 %v1173, %v1244
    %v1246 = vpop.f32.mrf.mxu0
    %1247 = vdwg.mxu0
    %v1248 = vxor.u32 %v1245, 2147483648
    %v1249 = vmul.f32 %v1248, 1.442695
    %v1250 = vpow.pop %v1249
    %v1251 = vadd.f32 %v1250, 1.0
    %v1252 = vrcp.pop %v1251
    %v1253 = vmul.f32 1.0, %v1252
    %v1254 = vlaneseq
    %v1255 = vshrl.u32 %v1254, 7
    %v1256 = vsub.s32 0, %v1255
    %v1257 = vrot.slane %v1253, %v1256
    %1259 = vbcast.lane.b32.xlu0 %v1257, 256
    %v1260 = vpop.permute.xlu0 %1259
    %s1262 = sor.u32 256, 8
    %1263 = vbcast.lane.b32.xlu0 %v1257, %s1262
    %v1264 = vpop.permute.xlu0 %1263
    %s1266 = sor.u32 256, 16
    %1267 = vbcast.lane.b32.xlu0 %v1257, %s1266
    %v1268 = vpop.permute.xlu0 %1267
    %s1270 = sor.u32 256, 24
    %1271 = vbcast.lane.b32.xlu0 %v1257, %s1270
    %v1272 = vpop.permute.xlu0 %1271
    %s1274 = sor.u32 256, 32
    %1275 = vbcast.lane.b32.xlu0 %v1257, %s1274
    %v1276 = vpop.permute.xlu0 %1275
    %s1278 = sor.u32 256, 40
    %1279 = vbcast.lane.b32.xlu0 %v1257, %s1278
    %v1280 = vpop.permute.xlu0 %1279
    %s1282 = sor.u32 256, 48
    %1283 = vbcast.lane.b32.xlu0 %v1257, %s1282
    %v1284 = vpop.permute.xlu0 %1283
    %s1286 = sor.u32 256, 56
    %1287 = vbcast.lane.b32.xlu0 %v1257, %s1286
    %v1288 = vpop.permute.xlu0 %1287
    %v1289 = vlaneseq
    %v1290 = vshrl.u32 %v1289, 7
    %v1291 = vsub.s32 1, %v1290
    %v1292 = vrot.slane %v1253, %v1291
    %1294 = vbcast.lane.b32.xlu0 %v1292, 256
    %v1295 = vpop.permute.xlu0 %1294
    %s1297 = sor.u32 256, 8
    %1298 = vbcast.lane.b32.xlu0 %v1292, %s1297
    %v1299 = vpop.permute.xlu0 %1298
    %s1301 = sor.u32 256, 16
    %1302 = vbcast.lane.b32.xlu0 %v1292, %s1301
    %v1303 = vpop.permute.xlu0 %1302
    %s1305 = sor.u32 256, 24
    %1306 = vbcast.lane.b32.xlu0 %v1292, %s1305
    %v1307 = vpop.permute.xlu0 %1306
    %s1309 = sor.u32 256, 32
    %1310 = vbcast.lane.b32.xlu0 %v1292, %s1309
    %v1311 = vpop.permute.xlu0 %1310
    %s1313 = sor.u32 256, 40
    %1314 = vbcast.lane.b32.xlu0 %v1292, %s1313
    %v1315 = vpop.permute.xlu0 %1314
    %s1317 = sor.u32 256, 48
    %1318 = vbcast.lane.b32.xlu0 %v1292, %s1317
    %v1319 = vpop.permute.xlu0 %1318
    %s1321 = sor.u32 256, 56
    %1322 = vbcast.lane.b32.xlu0 %v1292, %s1321
    %v1323 = vpop.permute.xlu0 %1322
    %v1324 = vmul.f32 %v29, %v1260
    %v1325 = vmul.f32 %v30, %v1260
    %v1326 = vmul.f32 %v31, %v1264
    %v1327 = vmul.f32 %v32, %v1264
    %v1328 = vmul.f32 %v33, %v1268
    %v1329 = vmul.f32 %v34, %v1268
    %v1330 = vmul.f32 %v35, %v1272
    %v1331 = vmul.f32 %v36, %v1272
    %v1332 = vmul.f32 %v37, %v1276
    %v1333 = vmul.f32 %v38, %v1276
    %v1334 = vmul.f32 %v39, %v1280
    %v1335 = vmul.f32 %v40, %v1280
    %v1336 = vmul.f32 %v41, %v1284
    %v1337 = vmul.f32 %v42, %v1284
    %v1338 = vmul.f32 %v43, %v1288
    %v1339 = vmul.f32 %v44, %v1288
    %v1340 = vmul.f32 %v45, %v1295
    %v1341 = vmul.f32 %v46, %v1295
    %v1342 = vmul.f32 %v47, %v1299
    %v1343 = vmul.f32 %v48, %v1299
    %v1344 = vmul.f32 %v49, %v1303
    %v1345 = vmul.f32 %v50, %v1303
    %v1346 = vmul.f32 %v51, %v1307
    %v1347 = vmul.f32 %v52, %v1307
    %v1348 = vmul.f32 %v53, %v1311
    %v1349 = vmul.f32 %v54, %v1311
    %v1350 = vmul.f32 %v55, %v1315
    %v1351 = vmul.f32 %v56, %v1315
    %v1352 = vmul.f32 %v57, %v1319
    %v1353 = vmul.f32 %v58, %v1319
    %v1354 = vmul.f32 %v59, %v1323
    %v1355 = vmul.f32 %v60, %v1323
    %1356 = vst [vmem:[#allocation5] sm:$0xff] %v1324
    %1357 = vst [vmem:[#allocation5 + $0x8] sm:$0xff] %v1325
    %1358 = vst [vmem:[#allocation5 + $0x10] sm:$0xff] %v1326
    %1359 = vst [vmem:[#allocation5 + $0x18] sm:$0xff] %v1327
    %1360 = vst [vmem:[#allocation5 + $0x20] sm:$0xff] %v1328
    %1361 = vst [vmem:[#allocation5 + $0x28] sm:$0xff] %v1329
    %1362 = vst [vmem:[#allocation5 + $0x30] sm:$0xff] %v1330
    %1363 = vst [vmem:[#allocation5 + $0x38] sm:$0xff] %v1331
    %1364 = vst [vmem:[#allocation5 + $0x40] sm:$0xff] %v1332
    %1365 = vst [vmem:[#allocation5 + $0x48] sm:$0xff] %v1333
    %1366 = vst [vmem:[#allocation5 + $0x50] sm:$0xff] %v1334
    %1367 = vst [vmem:[#allocation5 + $0x58] sm:$0xff] %v1335
    %1368 = vst [vmem:[#allocation5 + $0x60] sm:$0xff] %v1336
    %1369 = vst [vmem:[#allocation5 + $0x68] sm:$0xff] %v1337
    %1370 = vst [vmem:[#allocation5 + $0x70] sm:$0xff] %v1338
    %1371 = vst [vmem:[#allocation5 + $0x78] sm:$0xff] %v1339
    %1372 = vst [vmem:[#allocation5 + $0x80] sm:$0xff] %v1340
    %1373 = vst [vmem:[#allocation5 + $0x88] sm:$0xff] %v1341
    %1374 = vst [vmem:[#allocation5 + $0x90] sm:$0xff] %v1342
    %1375 = vst [vmem:[#allocation5 + $0x98] sm:$0xff] %v1343
    %1376 = vst [vmem:[#allocation5 + $0xa0] sm:$0xff] %v1344
    %1377 = vst [vmem:[#allocation5 + $0xa8] sm:$0xff] %v1345
    %1378 = vst [vmem:[#allocation5 + $0xb0] sm:$0xff] %v1346
    %1379 = vst [vmem:[#allocation5 + $0xb8] sm:$0xff] %v1347
    %1380 = vst [vmem:[#allocation5 + $0xc0] sm:$0xff] %v1348
    %1381 = vst [vmem:[#allocation5 + $0xc8] sm:$0xff] %v1349
    %1382 = vst [vmem:[#allocation5 + $0xd0] sm:$0xff] %v1350
    %1383 = vst [vmem:[#allocation5 + $0xd8] sm:$0xff] %v1351
    %1384 = vst [vmem:[#allocation5 + $0xe0] sm:$0xff] %v1352
    %1385 = vst [vmem:[#allocation5 + $0xe8] sm:$0xff] %v1353
    %1386 = vst [vmem:[#allocation5 + $0xf0] sm:$0xff] %v1354
    %1387 = vst [vmem:[#allocation5 + $0xf8] sm:$0xff] %v1355
    // Predicated region
    $region18: #{tpu_custom_call.1} parent=1 // pred_check
      _
    $region19: #{tpu_custom_call.1} parent=1 // pred_check_branch
      %1389 = sbr.rel (0) target = $region21
    $region20: #{tpu_custom_call.1} parent=1 // pred_region
      %s1391 = ssub.s32 4096, 4096
      %1392 = vsyncadd [#allocation4], %s1391
      %s1393 = sshll.u32 [#allocation5], 4
      %s1394 = int_to_ptr.vmem [resolvable:$true] %s1393
      %1399 = dma.vmem_to_hbm [thread:$0]  %s1394, 4096, %s3, [#allocation4], 256, 256, 16
    $region21: #{tpu_custom_call.1} parent=1 // pred_fallthru
      _
    // Predicated region
    $region22: #{tpu_custom_call.1} parent=1 // pred_check
      _
    $region23: #{tpu_custom_call.1} parent=1 // pred_check_branch
      %1401 = sbr.rel (0) target = $region25
    $region24: #{tpu_custom_call.1} parent=1 // pred_region
      %1402 = dma.done [#allocation4], 4096
    $region25: #{tpu_custom_call.1} parent=1 // pred_fallthru
      _
    %1403 = vsyncpa [#allocation3], 1
    %1404 = vsyncpa [#allocation4], 1

</llo_original>
